<compile_context>
chip_gen: v7x
topology: tpu7x:2x2x1
jax: 0.10.0
libtpu: 0.0.40
codegen_flags: <defaults>
</compile_context>

<pallas_src>
from functools import partial

import jax
import jax.numpy as jnp
from jax.experimental import pallas as pl
from jax.experimental.pallas import tpu as pltpu


_VMEM_LIMIT_BYTES = 32 * 1024 * 1024       # safe on v5e/v6e (128 MiB) and v7x (64 MiB)
_WORKING_SET_BUDGET = 16 * 1024 * 1024     # double-buffered streamed bytes per step
_ROW_TILE_CAP = 65536                      # rows per grid step (multiple of 8)


def _cdiv(a: int, b: int) -> int:
    return -(-a // b)


def _round_up(x: int, m: int) -> int:
    return _cdiv(x, m) * m


def _pick_row_tile(n_rows: int, row_bytes: int) -> int:
    """Largest row tile whose double-buffered streamed working set stays under
    the budget; row_bytes = f32 bytes per row over all streamed in/out arrays."""
    per_row = 2 * max(int(row_bytes), 4)            # x2 for double buffering
    tn = min(_ROW_TILE_CAP, _WORKING_SET_BUDGET // per_row, _round_up(n_rows, 8))
    return max(8, (tn // 8) * 8)


def _clamp_row_tile(tn: int, n_rows: int) -> int:
    tn = min(int(tn), _round_up(n_rows, 8))
    return max(8, (tn // 8) * 8)


# ----------------------------------------------------------------------------
# Generic tiled norms kernel (user-supplied library):
#   norms[j] = ||time_derivs||_F / ||thetas[:, j]||_2
# Each grid step writes independent per-tile partial sums of squares.
# ----------------------------------------------------------------------------
def _norms_kernel(td_ref, th_ref, col_sq_ref, td_sq_ref, *, n_rows, tn):
    i = pl.program_id(0)
    last = pl.num_programs(0) - 1

    def emit(masked):
        td = td_ref[...].astype(jnp.float32)      # (tn, kt)
        th = th_ref[...].astype(jnp.float32)      # (tn, m)
        if masked:
            # Un-padded inputs: the tail tile's out-of-bounds rows hold
            # unspecified data, so select (NaN-safe) rather than multiply.
            row = i * tn + jax.lax.broadcasted_iota(jnp.int32, (tn, 1), 0)
            valid = row < n_rows
            td = jnp.where(valid, td, 0.0)
            th = jnp.where(valid, th, 0.0)
        col_sq_ref[...] = jnp.sum(th * th, axis=0, keepdims=True)   # (1, m)
        td_sq_ref[...] = jnp.sum(td * td, axis=0, keepdims=True)    # (1, kt)

    if n_rows % tn != 0:
        @pl.when(i != last)
        def _interior():
            emit(masked=False)

        @pl.when(i == last)
        def _tail():
            emit(masked=True)
    else:
        emit(masked=False)


def compute_norms(time_derivs: jax.Array, thetas: jax.Array, *, tn=None) -> jax.Array:
    """Returns (1, M): ||time_derivs||_F / ||thetas[:, j]||_2, streaming both
    arrays once (no wrapper padding / repacking)."""
    n, kt = time_derivs.shape
    n2, m = thetas.shape
    assert n == n2, "time_derivs and thetas must share the sample dimension"

    if tn is None:
        tn = _pick_row_tile(n, 4 * (kt + m))
    tn = _clamp_row_tile(tn, n)
    num_tiles = _cdiv(n, tn)

    cost = pl.CostEstimate(
        flops=2 * n * (m + kt),
        transcendentals=0,
        bytes_accessed=4 * (n * (m + kt) + num_tiles * (m + kt)),
    )

    col_sq, td_sq = pl.pallas_call(
        partial(_norms_kernel, n_rows=n, tn=tn),
        out_shape=(
            jax.ShapeDtypeStruct((num_tiles, 1, m), jnp.float32),
            jax.ShapeDtypeStruct((num_tiles, 1, kt), jnp.float32),
        ),
        grid_spec=pltpu.PrefetchScalarGridSpec(
            num_scalar_prefetch=0,
            grid=(num_tiles,),
            in_specs=[
                pl.BlockSpec((tn, kt), lambda i: (i, 0)),
                pl.BlockSpec((tn, m), lambda i: (i, 0)),
            ],
            out_specs=(
                pl.BlockSpec((None, 1, m), lambda i: (i, 0, 0)),
                pl.BlockSpec((None, 1, kt), lambda i: (i, 0, 0)),
            ),
        ),
        compiler_params=pltpu.CompilerParams(
            dimension_semantics=("parallel",),
            vmem_limit_bytes=_VMEM_LIMIT_BYTES,
        ),
        cost_estimate=cost,
    )(time_derivs, thetas)

    # Tiny epilogue over (num_tiles, m): tree-style sum then sqrt * rsqrt.
    td_total = jnp.sum(td_sq)                     # scalar
    col_total = jnp.sum(col_sq, axis=0)           # (1, m)
    # Note: an all-zero thetas column yields +inf here, same as torch's divide.
    return jnp.sqrt(td_total) * jax.lax.rsqrt(col_total)


# ----------------------------------------------------------------------------
# Fused default library: build polynomial thetas tiles AND the per-tile
# norm partial sums in a single HBM pass (thetas written once, never re-read).
#   thetas = [1, u, u^2, u^3, data],  time_derivs = prediction
# ----------------------------------------------------------------------------
def _fused_poly_kernel(pred_ref, data_ref, theta_ref, col_sq_ref, td_sq_ref,
                       *, n_rows, tn):
    i = pl.program_id(0)
    last = pl.num_programs(0) - 1

    def emit(masked):
        u = pred_ref[...].astype(jnp.float32)     # (tn, 1)
        d = data_ref[...].astype(jnp.float32)     # (tn, D)
        u2 = u * u
        # Assemble the whole tile once -> single store + single partial write
        # (v5e has one vst slot; avoid 5 lane-masked column stores).
        block = jnp.concatenate([jnp.ones_like(u), u, u2, u2 * u, d], axis=1)
        theta_ref[...] = block.astype(theta_ref.dtype)

        if masked:
            row = i * tn + jax.lax.broadcasted_iota(jnp.int32, (tn, 1), 0)
            valid = row < n_rows
            block = jnp.where(valid, block, 0.0)
            u2 = jnp.where(valid, u2, 0.0)

        col_sq_ref[...] = jnp.sum(block * block, axis=0, keepdims=True)  # (1, m)
        td_sq_ref[...] = jnp.sum(u2, axis=0, keepdims=True)              # (1, 1)

    if n_rows % tn != 0:
        @pl.when(i != last)
        def _interior():
            emit(masked=False)

        @pl.when(i == last)
        def _tail():
            emit(masked=True)
    else:
        emit(masked=False)


def poly_library_with_norms(prediction: jax.Array, data: jax.Array, *, tn=None):
    """Fused default library. Returns (time_derivs, thetas, norms(1, M))."""
    n, one = prediction.shape
    assert one == 1, "prediction must be (N, 1)"
    n2, d = data.shape
    assert n == n2, "prediction and data must share the sample dimension"
    m = 4 + d

    if tn is None:
        tn = _pick_row_tile(n, 4 * (1 + d + m))
    tn = _clamp_row_tile(tn, n)
    num_tiles = _cdiv(n, tn)

    cost = pl.CostEstimate(
        flops=n * (4 + 2 * m),
        transcendentals=0,
        bytes_accessed=4 * (n * (1 + d) + n * m + num_tiles * (m + 1)),
    )

    thetas, col_sq, td_sq = pl.pallas_call(
        partial(_fused_poly_kernel, n_rows=n, tn=tn),
        out_shape=(
            jax.ShapeDtypeStruct((n, m), prediction.dtype),
            jax.ShapeDtypeStruct((num_tiles, 1, m), jnp.float32),
            jax.ShapeDtypeStruct((num_tiles, 1, 1), jnp.float32),
        ),
        grid_spec=pltpu.PrefetchScalarGridSpec(
            num_scalar_prefetch=0,
            grid=(num_tiles,),
            in_specs=[
                pl.BlockSpec((tn, 1), lambda i: (i, 0)),
                pl.BlockSpec((tn, d), lambda i: (i, 0)),
            ],
            out_specs=(
                pl.BlockSpec((tn, m), lambda i: (i, 0)),
                pl.BlockSpec((None, 1, m), lambda i: (i, 0, 0)),
                pl.BlockSpec((None, 1, 1), lambda i: (i, 0, 0)),
            ),
        ),
        compiler_params=pltpu.CompilerParams(
            dimension_semantics=("parallel",),
            vmem_limit_bytes=_VMEM_LIMIT_BYTES,
        ),
        cost_estimate=cost,
    )(prediction, data)

    td_total = jnp.sum(td_sq)
    col_total = jnp.sum(col_sq, axis=0)           # (1, m)
    norms = jnp.sqrt(td_total) * jax.lax.rsqrt(col_total)
    return prediction, thetas, norms


# ----------------------------------------------------------------------------
# JAX/Pallas port of the PyTorch `Library` base module
# ----------------------------------------------------------------------------
class Library:
    """forward(input) -> (time_derivs, thetas); also sets
    self.norms = (||time_derivs||_F / ||thetas||_2 per column).detach().squeeze()
    """

    def __init__(self, library_fn=None, row_tile=None) -> None:
        # TODO(synk): the real `self.library` (autograd-derived time/space
        # derivatives of the prediction network) is abstract in the PyTorch
        # source; library_fn=None uses a deterministic polynomial-feature
        # stand-in fused with the norm computation in one Pallas pass.
        self.library = library_fn
        self.row_tile = row_tile
        self.norms = None

    def __call__(self, inputs):
        if self.library is None:
            prediction, data = inputs
            time_derivs, thetas, norms = poly_library_with_norms(
                prediction, data, tn=self.row_tile)
        else:
            time_derivs, thetas = self.library(inputs)
            norms = compute_norms(time_derivs, thetas, tn=self.row_tile)
        # .detach().squeeze()  ->  stop_gradient + squeeze
        self.norms = jnp.squeeze(jax.lax.stop_gradient(norms))
        return (time_derivs, thetas)


# ----------------------------------------------------------------------------
# Demo / self-check
# ----------------------------------------------------------------------------
if __name__ == "__main__":
    key = jax.random.PRNGKey(0)
    k_pred, k_data, k_pred2, k_data2 = jax.random.split(key, 4)

    # --- 1. Fused default-library path (multi-tile grid + ragged tail) -----
    N, D = 200, 3                                   # 200 % 64 != 0 -> tail mask path
    prediction = jax.random.normal(k_pred, (N, 1), dtype=jnp.float32)
    data = jax.random.normal(k_data, (N, D), dtype=jnp.float32)

    lib = Library(row_tile=64)
    time_derivs, thetas = lib((prediction, data))
    norms = jax.block_until_ready(lib.norms)
    thetas = jax.block_until_ready(thetas)
    time_derivs = jax.block_until_ready(time_derivs)

    u = prediction
    thetas_ref = jnp.concatenate(
        [jnp.ones_like(u), u, u * u, u * u * u, data], axis=1)
    norms_ref = (jnp.linalg.norm(time_derivs)
                 / jnp.linalg.norm(thetas_ref, axis=0, keepdims=True)).squeeze()

    assert thetas.shape == (N, 4 + D)
    assert jnp.allclose(thetas, thetas_ref, rtol=1e-6, atol=1e-6)
    assert norms.shape == norms_ref.shape == (4 + D,)
    assert jnp.allclose(norms, norms_ref, rtol=1e-4, atol=1e-5)

    # --- 1b. Fused path, exact-divide (single tile, unmasked static branch) -
    lib_big = Library()                             # default tile covers all rows
    td_b, th_b = lib_big((prediction, data))
    norms_b = jax.block_until_ready(lib_big.norms)
    th_b = jax.block_until_ready(th_b)
    assert jnp.allclose(th_b, thetas_ref, rtol=1e-6, atol=1e-6)
    assert jnp.allclose(norms_b, norms_ref, rtol=1e-4, atol=1e-5)

    # --- 2. Generic compute_norms path (user-supplied library) -------------
    N2, D2 = 300, 3                                 # 300 % 64 != 0 -> tail mask path
    prediction2 = jax.random.normal(k_pred2, (N2, 1), dtype=jnp.float32)
    data2 = jax.random.normal(k_data2, (N2, D2), dtype=jnp.float32)

    def custom_library(inputs):
        pred, dat = inputs
        return pred, jnp.concatenate([dat, jnp.sin(pred)], axis=1)

    lib2 = Library(library_fn=custom_library, row_tile=64)
    td2, th2 = lib2((prediction2, data2))
    norms2 = jax.block_until_ready(lib2.norms)

    ref2 = (jnp.linalg.norm(td2)
            / jnp.linalg.norm(th2, axis=0, keepdims=True)).squeeze()
    assert norms2.shape == ref2.shape == (D2 + 1,)
    assert jnp.allclose(norms2, ref2, rtol=1e-4, atol=1e-5)

    print("KERNEL_OK")
</pallas_src>

<mosaic_0001>
module attributes {stable_mosaic.version = 11 : i64} {
  func.func @_fused_poly_kernel(%arg0: i32, %arg1: memref<64x1xf32, #tpu.memory_space<vmem>>, %arg2: memref<64x3xf32, #tpu.memory_space<vmem>>, %arg3: memref<64x7xf32, #tpu.memory_space<vmem>>, %arg4: memref<1x1x7xf32, #tpu.memory_space<vmem>>, %arg5: memref<1x1x1xf32, #tpu.memory_space<vmem>>) attributes {dimension_semantics = [#tpu.dimension_semantics<parallel>], iteration_bounds = array<i64: 4>, scalar_prefetch = 0 : i64, scratch_operands = 0 : i64, tpu.core_type = #tpu.core_type<tc>, window_params = [{transform_indices = @transform_0, window_bounds = array<i64: 64, 1>}, {transform_indices = @transform_1, window_bounds = array<i64: 64, 3>}, {transform_indices = @transform_2, window_bounds = array<i64: 64, 7>}, {transform_indices = @transform_3, window_bounds = array<i64: 1, 1, 7>}, {transform_indices = @transform_4, window_bounds = array<i64: 1, 1, 1>}]} {
    %c3_i32 = arith.constant 3 : i32
    %0 = arith.cmpi ne, %arg0, %c3_i32 : i32
    %1 = arith.extui %0 : i1 to i32
    %c0_i32 = arith.constant 0 : i32
    %2 = arith.cmpi ne, %1, %c0_i32 : i32
    scf.if %2 {
      %c0 = arith.constant 0 : index
      %c0_2 = arith.constant 0 : index
      %6 = vector.load %arg1[%c0, %c0_2] : memref<64x1xf32, #tpu.memory_space<vmem>>, vector<64x1xf32>
      %c0_3 = arith.constant 0 : index
      %c0_4 = arith.constant 0 : index
      %7 = vector.load %arg2[%c0_3, %c0_4] : memref<64x3xf32, #tpu.memory_space<vmem>>, vector<64x3xf32>
      %8 = arith.mulf %6, %6 : vector<64x1xf32>
      %cst = arith.constant 1.000000e+00 : f32
      %9 = vector.broadcast %cst : f32 to vector<64x1xf32>
      %10 = arith.mulf %8, %6 : vector<64x1xf32>
      %11 = tpu.concatenate %9, %6, %8, %10, %7 in 1 : vector<64x1xf32>, vector<64x1xf32>, vector<64x1xf32>, vector<64x1xf32>, vector<64x3xf32> -> vector<64x7xf32>
      %c0_5 = arith.constant 0 : index
      %c0_6 = arith.constant 0 : index
      %12 = vector.load %arg3[%c0_5, %c0_6] : memref<64x7xf32, #tpu.memory_space<vmem>>, vector<64x7xf32>
      tpu.vector_store %arg3[%c0_5, %c0_6], %11 {strides = array<i32>} : memref<64x7xf32, #tpu.memory_space<vmem>>, vector<64x7xf32>,
      %13 = arith.mulf %11, %11 : vector<64x7xf32>
      %cst_7 = arith.constant dense<0.000000e+00> : vector<7xf32>
      %14 = vector.multi_reduction <add>, %13, %cst_7 [0] : vector<64x7xf32> to vector<7xf32>
      %15 = vector.shape_cast %14 : vector<7xf32> to vector<1x7xf32>
      %c0_8 = arith.constant 0 : index
      %c0_9 = arith.constant 0 : index
      %c0_10 = arith.constant 0 : index
      %16 = vector.load %arg4[%c0_8, %c0_9, %c0_10] : memref<1x1x7xf32, #tpu.memory_space<vmem>>, vector<1x1x7xf32>
      %17 = vector.shape_cast %16 : vector<1x1x7xf32> to vector<1x7xf32>
      %18 = vector.shape_cast %15 : vector<1x7xf32> to vector<1x1x7xf32>
      tpu.vector_store %arg4[%c0_8, %c0_9, %c0_10], %18 {strides = array<i32>} : memref<1x1x7xf32, #tpu.memory_space<vmem>>, vector<1x1x7xf32>,
      %cst_11 = arith.constant dense<0.000000e+00> : vector<1xf32>
      %19 = vector.multi_reduction <add>, %8, %cst_11 [0] : vector<64x1xf32> to vector<1xf32>
      %20 = vector.shape_cast %19 : vector<1xf32> to vector<1x1xf32>
      %c0_12 = arith.constant 0 : index
      %c0_13 = arith.constant 0 : index
      %c0_14 = arith.constant 0 : index
      %21 = vector.load %arg5[%c0_12, %c0_13, %c0_14] : memref<1x1x1xf32, #tpu.memory_space<vmem>>, vector<1x1x1xf32>
      %22 = vector.shape_cast %21 : vector<1x1x1xf32> to vector<1x1xf32>
      %23 = vector.shape_cast %20 : vector<1x1xf32> to vector<1x1x1xf32>
      tpu.vector_store %arg5[%c0_12, %c0_13, %c0_14], %23 {strides = array<i32>} : memref<1x1x1xf32, #tpu.memory_space<vmem>>, vector<1x1x1xf32>,
    } else {
    }
    %c3_i32_0 = arith.constant 3 : i32
    %3 = arith.cmpi eq, %arg0, %c3_i32_0 : i32
    %4 = arith.extui %3 : i1 to i32
    %c0_i32_1 = arith.constant 0 : i32
    %5 = arith.cmpi ne, %4, %c0_i32_1 : i32
    scf.if %5 {
      %c0 = arith.constant 0 : index
      %c0_2 = arith.constant 0 : index
      %6 = vector.load %arg1[%c0, %c0_2] : memref<64x1xf32, #tpu.memory_space<vmem>>, vector<64x1xf32>
      %c0_3 = arith.constant 0 : index
      %c0_4 = arith.constant 0 : index
      %7 = vector.load %arg2[%c0_3, %c0_4] : memref<64x3xf32, #tpu.memory_space<vmem>>, vector<64x3xf32>
      %8 = arith.mulf %6, %6 : vector<64x1xf32>
      %cst = arith.constant 1.000000e+00 : f32
      %9 = vector.broadcast %cst : f32 to vector<64x1xf32>
      %10 = arith.mulf %8, %6 : vector<64x1xf32>
      %11 = tpu.concatenate %9, %6, %8, %10, %7 in 1 : vector<64x1xf32>, vector<64x1xf32>, vector<64x1xf32>, vector<64x1xf32>, vector<64x3xf32> -> vector<64x7xf32>
      %c0_5 = arith.constant 0 : index
      %c0_6 = arith.constant 0 : index
      %12 = vector.load %arg3[%c0_5, %c0_6] : memref<64x7xf32, #tpu.memory_space<vmem>>, vector<64x7xf32>
      tpu.vector_store %arg3[%c0_5, %c0_6], %11 {strides = array<i32>} : memref<64x7xf32, #tpu.memory_space<vmem>>, vector<64x7xf32>,
      %c64_i32 = arith.constant 64 : i32
      %13 = arith.muli %arg0, %c64_i32 : i32
      %14 = tpu.iota {dimensions = array<i32: 0>} : vector<64x1xi32>
      %15 = vector.broadcast %13 : i32 to vector<64x1xi32>
      %16 = arith.addi %15, %14 : vector<64x1xi32>
      %c200_i32 = arith.constant 200 : i32
      %17 = vector.broadcast %c200_i32 : i32 to vector<64x1xi32>
      %18 = arith.cmpi slt, %16, %17 : vector<64x1xi32>
      %cst_7 = arith.constant 0.000000e+00 : f32
      %19 = vector.shape_cast %18 : vector<64x1xi1> to vector<64x1xi1>
      %20 = vector.broadcast %19 : vector<64x1xi1> to vector<64x7xi1>
      %21 = vector.broadcast %cst_7 : f32 to vector<64x7xf32>
      %22 = arith.select %20, %11, %21 : vector<64x7xi1>, vector<64x7xf32>
      %cst_8 = arith.constant 0.000000e+00 : f32
      %23 = vector.broadcast %cst_8 : f32 to vector<64x1xf32>
      %24 = arith.select %18, %8, %23 : vector<64x1xi1>, vector<64x1xf32>
      %25 = arith.mulf %22, %22 : vector<64x7xf32>
      %cst_9 = arith.constant dense<0.000000e+00> : vector<7xf32>
      %26 = vector.multi_reduction <add>, %25, %cst_9 [0] : vector<64x7xf32> to vector<7xf32>
      %27 = vector.shape_cast %26 : vector<7xf32> to vector<1x7xf32>
      %c0_10 = arith.constant 0 : index
      %c0_11 = arith.constant 0 : index
      %c0_12 = arith.constant 0 : index
      %28 = vector.load %arg4[%c0_10, %c0_11, %c0_12] : memref<1x1x7xf32, #tpu.memory_space<vmem>>, vector<1x1x7xf32>
      %29 = vector.shape_cast %28 : vector<1x1x7xf32> to vector<1x7xf32>
      %30 = vector.shape_cast %27 : vector<1x7xf32> to vector<1x1x7xf32>
      tpu.vector_store %arg4[%c0_10, %c0_11, %c0_12], %30 {strides = array<i32>} : memref<1x1x7xf32, #tpu.memory_space<vmem>>, vector<1x1x7xf32>,
      %cst_13 = arith.constant dense<0.000000e+00> : vector<1xf32>
      %31 = vector.multi_reduction <add>, %24, %cst_13 [0] : vector<64x1xf32> to vector<1xf32>
      %32 = vector.shape_cast %31 : vector<1xf32> to vector<1x1xf32>
      %c0_14 = arith.constant 0 : index
      %c0_15 = arith.constant 0 : index
      %c0_16 = arith.constant 0 : index
      %33 = vector.load %arg5[%c0_14, %c0_15, %c0_16] : memref<1x1x1xf32, #tpu.memory_space<vmem>>, vector<1x1x1xf32>
      %34 = vector.shape_cast %33 : vector<1x1x1xf32> to vector<1x1xf32>
      %35 = vector.shape_cast %32 : vector<1x1xf32> to vector<1x1x1xf32>
      tpu.vector_store %arg5[%c0_14, %c0_15, %c0_16], %35 {strides = array<i32>} : memref<1x1x1xf32, #tpu.memory_space<vmem>>, vector<1x1x1xf32>,
    } else {
    }
    return
  }
  func.func @transform_0(%arg0: i32) -> (i32, i32) {
    %c0_i32 = arith.constant 0 : i32
    %c0_i32_0 = arith.constant 0 : i32
    return %arg0, %c0_i32 : i32, i32
  }
  func.func @transform_1(%arg0: i32) -> (i32, i32) {
    %c0_i32 = arith.constant 0 : i32
    %c0_i32_0 = arith.constant 0 : i32
    return %arg0, %c0_i32 : i32, i32
  }
  func.func @transform_2(%arg0: i32) -> (i32, i32) {
    %c0_i32 = arith.constant 0 : i32
    %c0_i32_0 = arith.constant 0 : i32
    return %arg0, %c0_i32 : i32, i32
  }
  func.func @transform_3(%arg0: i32) -> (i32, i32, i32) {
    %c0_i32 = arith.constant 0 : i32
    %c0_i32_0 = arith.constant 0 : i32
    %c0_i32_1 = arith.constant 0 : i32
    return %arg0, %c0_i32, %c0_i32_0 : i32, i32, i32
  }
  func.func @transform_4(%arg0: i32) -> (i32, i32, i32) {
    %c0_i32 = arith.constant 0 : i32
    %c0_i32_0 = arith.constant 0 : i32
    %c0_i32_1 = arith.constant 0 : i32
    return %arg0, %c0_i32, %c0_i32_0 : i32, i32, i32
  }
}

</mosaic_0001>

<llo_original>
// kernel: tpu_custom_call.1
$region0: #{tpu_custom_call.1}
  #allocation0 [shape = 'u32[]', space=smem, size = 0x4, offset = 0x4, fixed_abs, tag = 'smem constant byte address 0x4 - core index']
  #allocation1 [shape = 'u32[144,128]{1,0:T(1,128)}', space=vmem, size = 0x12000, scoped, tag = 'internal scratch']
  %s0 = inlined_call_operand.vmem [shape: f32[200,1], index: 0, kind: input, shape index: {}]
  %s1 = inlined_call_operand.vmem [shape: f32[200,3], index: 1, kind: input, shape index: {}]
  %s2 = inlined_call_operand.vmem [shape: f32[200,7], index: 2, kind: output, shape index: {0}]
  %s3 = inlined_call_operand.hbm [shape: f32[4,1,7], index: 3, kind: output, shape index: {1}]
  %s4 = inlined_call_operand.vmem [shape: f32[4,1,1], index: 4, kind: output, shape index: {2}]
  %5 = xla_tuple %s2, %s3, %s4
  %s6 = sld [smem:[#allocation0]]
  $region113: #{tpu_custom_call.1} parent=0
    _
  %s8 = ssub.s32 1, %s6
  %s9 = scalar_select 0, %s8, %s6
  $region1: #{tpu_custom_call.1} parent=0
    #allocation2 [shape = 'u8[65536]{0}', space=vmem, size = 0x10000, scoped, tag = 'output window, operand 0']
    #allocation3 [shape = 'u8[1024]{0}', space=vmem, size = 0x400, scoped, tag = 'output window, operand 1']
    #allocation4 [shape = 's32[2]{0}', space=sflag, size = 0x8, scoped, tag = 'scoped memory for tpu_custom_call.1']
    %10 = vsyncpa [#allocation4], 0
    %s11 = scalar_lea.sflag [#allocation4], 1
    %12 = vsyncpa %s11, 0
    loop: start=0, step=1, limit=6
    $region2: #{tpu_custom_call.1} parent=1 // loop_pre_header
      _
    $region3: #{tpu_custom_call.1} parent=1 // loop_header
      %s14 = sphi 0, %s18
      %p15 = scmp.ge.s32.totalorder %s14, 6
      %s24 = sphi 0, %s26
      %s27 = sphi 0, %s24
      %s28 = sphi 0, %s27
      %s44 = sphi 0, %s28
      %s50 = sphi 0, %s52
      %s53 = sphi 0, %s50
      %s54 = sphi 0, %s53
      %s70 = sphi 0, %s54
      %s76 = sphi 0, %s78
      %s79 = sphi 0, %s76
      %s80 = sphi 0, %s79
      %s96 = sphi 0, %s80
      %s102 = sphi 0, %s104
      %s105 = sphi 0, %s102
      %s106 = sphi 0, %s105
      %s122 = sphi 0, %s106
      %s128 = sphi 0, %s130
      %s131 = sphi 0, %s128
      %s132 = sphi 0, %s131
      %s148 = sphi 0, %s132
    $region4: #{tpu_custom_call.1} parent=1 // loop_header_branch
      %17 = sbr.rel (%p15) target = $region8
    $region5: #{tpu_custom_call.1} parent=1 // loop_body
      %s19 = ssub.s32 %s14, 1
      %s20 = ssub.s32 %s14, 2
      %s21 = sadd.s32 %s14, 1
      %s22 = ssub.s32 %s14, %s21
      %p23 = scmp.eq.s32.totalorder %s22, 0
      %s25 = sadd.s32 %s24, 1
      %s26 = scalar_select %p23, %s24, %s25
      %p29 = pneg %p23
      %p30 = scmp.eq.s32.totalorder %s14, 3
      %p31 = por %p29, %p30
      %p32 = scmp.ne.s32.totalorder %s24, %s27
      %p33 = scmp.eq.s32.totalorder %s14, 0
      %p34 = por %p32, %p33
      %p35 = scmp.ne.s32.totalorder %s24, %s27
      %p36 = scmp.eq.s32.totalorder %s19, 3
      %p37 = por %p35, %p36
      %p38 = scmp.ne.s32.totalorder %s27, %s28
      %p39 = scmp.eq.s32.totalorder %s19, 0
      %p40 = por %p38, %p39
      %p41 = scmp.ne.s32.totalorder %s27, %s28
      %p42 = scmp.eq.s32.totalorder %s20, 3
      %p43 = por %p41, %p42
      %p45 = scmp.ne.s32.totalorder %s28, %s44
      %p46 = scmp.eq.s32.totalorder %s20, 0
      %p47 = por %p45, %p46
      %s48 = ssub.s32 %s14, %s21
      %p49 = scmp.eq.s32.totalorder %s48, 0
      %s51 = sadd.s32 %s50, 1
      %s52 = scalar_select %p49, %s50, %s51
      %p55 = pneg %p49
      %p56 = scmp.eq.s32.totalorder %s14, 3
      %p57 = por %p55, %p56
      %p58 = scmp.ne.s32.totalorder %s50, %s53
      %p59 = scmp.eq.s32.totalorder %s14, 0
      %p60 = por %p58, %p59
      %p61 = scmp.ne.s32.totalorder %s50, %s53
      %p62 = scmp.eq.s32.totalorder %s19, 3
      %p63 = por %p61, %p62
      %p64 = scmp.ne.s32.totalorder %s53, %s54
      %p65 = scmp.eq.s32.totalorder %s19, 0
      %p66 = por %p64, %p65
      %p67 = scmp.ne.s32.totalorder %s53, %s54
      %p68 = scmp.eq.s32.totalorder %s20, 3
      %p69 = por %p67, %p68
      %p71 = scmp.ne.s32.totalorder %s54, %s70
      %p72 = scmp.eq.s32.totalorder %s20, 0
      %p73 = por %p71, %p72
      %s74 = ssub.s32 %s14, %s21
      %p75 = scmp.eq.s32.totalorder %s74, 0
      %s77 = sadd.s32 %s76, 1
      %s78 = scalar_select %p75, %s76, %s77
      %p81 = pneg %p75
      %p82 = scmp.eq.s32.totalorder %s14, 3
      %p83 = por %p81, %p82
      %p84 = scmp.ne.s32.totalorder %s76, %s79
      %p85 = scmp.eq.s32.totalorder %s14, 0
      %p86 = por %p84, %p85
      %p87 = scmp.ne.s32.totalorder %s76, %s79
      %p88 = scmp.eq.s32.totalorder %s19, 3
      %p89 = por %p87, %p88
      %p90 = scmp.ne.s32.totalorder %s79, %s80
      %p91 = scmp.eq.s32.totalorder %s19, 0
      %p92 = por %p90, %p91
      %p93 = scmp.ne.s32.totalorder %s79, %s80
      %p94 = scmp.eq.s32.totalorder %s20, 3
      %p95 = por %p93, %p94
      %p97 = scmp.ne.s32.totalorder %s80, %s96
      %p98 = scmp.eq.s32.totalorder %s20, 0
      %p99 = por %p97, %p98
      %s100 = ssub.s32 %s14, %s21
      %p101 = scmp.eq.s32.totalorder %s100, 0
      %s103 = sadd.s32 %s102, 1
      %s104 = scalar_select %p101, %s102, %s103
      %p107 = pneg %p101
      %p108 = scmp.eq.s32.totalorder %s14, 3
      %p109 = por %p107, %p108
      %p110 = scmp.ne.s32.totalorder %s102, %s105
      %p111 = scmp.eq.s32.totalorder %s14, 0
      %p112 = por %p110, %p111
      %p113 = scmp.ne.s32.totalorder %s102, %s105
      %p114 = scmp.eq.s32.totalorder %s19, 3
      %p115 = por %p113, %p114
      %p116 = scmp.ne.s32.totalorder %s105, %s106
      %p117 = scmp.eq.s32.totalorder %s19, 0
      %p118 = por %p116, %p117
      %p119 = scmp.ne.s32.totalorder %s105, %s106
      %p120 = scmp.eq.s32.totalorder %s20, 3
      %p121 = por %p119, %p120
      %p123 = scmp.ne.s32.totalorder %s106, %s122
      %p124 = scmp.eq.s32.totalorder %s20, 0
      %p125 = por %p123, %p124
      %s126 = ssub.s32 %s14, %s21
      %p127 = scmp.eq.s32.totalorder %s126, 0
      %s129 = sadd.s32 %s128, 1
      %s130 = scalar_select %p127, %s128, %s129
      %p133 = pneg %p127
      %p134 = scmp.eq.s32.totalorder %s14, 3
      %p135 = por %p133, %p134
      %p136 = scmp.ne.s32.totalorder %s128, %s131
      %p137 = scmp.eq.s32.totalorder %s14, 0
      %p138 = por %p136, %p137
      %p139 = scmp.ne.s32.totalorder %s128, %s131
      %p140 = scmp.eq.s32.totalorder %s19, 3
      %p141 = por %p139, %p140
      %p142 = scmp.ne.s32.totalorder %s131, %s132
      %p143 = scmp.eq.s32.totalorder %s19, 0
      %p144 = por %p142, %p143
      %p145 = scmp.ne.s32.totalorder %s131, %s132
      %p146 = scmp.eq.s32.totalorder %s20, 3
      %p147 = por %p145, %p146
      %p149 = scmp.ne.s32.totalorder %s132, %s148
      %p150 = scmp.eq.s32.totalorder %s20, 0
      %p151 = por %p149, %p150
      %p152 = scmp.le.s32.totalorder 1, %s14
      %p153 = scmp.lt.s32.totalorder %s14, 5
      %p154 = pnand %p152, %p153
      %p155 = pneg %p154
      // Predicated region
      $region9: #{tpu_custom_call.1} parent=5 // pred_check
        _
      $region10: #{tpu_custom_call.1} parent=5 // pred_check_branch
        %157 = sbr.rel (%p154) target = $region12
      $region11: #{tpu_custom_call.1} parent=5 // pred_region
        %s158 = ssub.s32 %s14, 1
      $region12: #{tpu_custom_call.1} parent=5 // pred_fallthru
        _
      %p159 = scmp.lt.s32.totalorder %s14, 4
      // Predicated region
      $region13: #{tpu_custom_call.1} parent=5 // pred_check
        %p160 = pneg %p159
      $region14: #{tpu_custom_call.1} parent=5 // pred_check_branch
        %162 = sbr.rel (%p160) target = $region16
      $region15: #{tpu_custom_call.1} parent=5 // pred_region
        // Predicated region
        $region17: #{tpu_custom_call.1} parent=15 // pred_check
          %p163 = pneg %p34
        $region18: #{tpu_custom_call.1} parent=15 // pred_check_branch
          %165 = sbr.rel (%p163) target = $region20
        $region19: #{tpu_custom_call.1} parent=15 // pred_region
          %s166 = smul.u32 8, %s14
          %s167 = ssub.s32 25, %s166
          %p168 = scmp.lt.s32.totalorder %s167, 8
          %s169 = scalar_select %p168, %s167, 8
          %s170 = smul.u32 128, %s169
          %p171 = scmp.lt.s32.totalorder %s166, 24
          %s172 = scalar_select %p171, %s166, 24
          %s173 = smul.addr %s172, 8
          %s174 = scalar_lea.vmem %s0, %s173
          %s175 = smul.u32 8, %s14
          %s176 = ssub.s32 25, %s175
          %p177 = scmp.lt.s32.totalorder %s176, 8
          %s178 = scalar_select %p177, %s176, 8
          %s179 = smul.u32 128, %s178
        $region20: #{tpu_custom_call.1} parent=15 // pred_fallthru
          _
        // Predicated region
        $region21: #{tpu_custom_call.1} parent=15 // pred_check
          %p180 = pneg %p60
        $region22: #{tpu_custom_call.1} parent=15 // pred_check_branch
          %182 = sbr.rel (%p180) target = $region24
        $region23: #{tpu_custom_call.1} parent=15 // pred_region
          %s183 = smul.u32 8, %s14
          %s184 = ssub.s32 25, %s183
          %p185 = scmp.lt.s32.totalorder %s184, 8
          %s186 = scalar_select %p185, %s184, 8
          %s187 = smul.u32 128, %s186
          %p188 = scmp.lt.s32.totalorder %s183, 24
          %s189 = scalar_select %p188, %s183, 24
          %s190 = smul.addr %s189, 8
          %s191 = scalar_lea.vmem %s1, %s190
          %s192 = smul.u32 8, %s14
          %s193 = ssub.s32 25, %s192
          %p194 = scmp.lt.s32.totalorder %s193, 8
          %s195 = scalar_select %p194, %s193, 8
          %s196 = smul.u32 128, %s195
        $region24: #{tpu_custom_call.1} parent=15 // pred_fallthru
          _
      $region16: #{tpu_custom_call.1} parent=5 // pred_fallthru
        _
      %p197 = scmp.le.s32.totalorder 1, %s14
      %p198 = scmp.lt.s32.totalorder %s14, 5
      %p199 = pnand %p197, %p198
      %p200 = pneg %p199
      // Predicated region
      $region25: #{tpu_custom_call.1} parent=5 // pred_check
        _
      $region26: #{tpu_custom_call.1} parent=5 // pred_check_branch
        %202 = sbr.rel (%p199) target = $region28
      $region27: #{tpu_custom_call.1} parent=5 // pred_region
        %s203 = ssub.s32 %s14, 1
        %s204 = smul.u32 8, %s19
        %s205 = ssub.s32 25, %s204
        %p206 = scmp.lt.s32.totalorder %s205, 8
        %s207 = scalar_select %p206, %s205, 8
        %s208 = smul.u32 128, %s207
        %p209 = scmp.lt.s32.totalorder %s204, 24
        %s210 = scalar_select %p209, %s204, 24
        %s211 = smul.addr %s210, 8
        %s212 = scalar_lea.vmem %s0, %s211
        %p213 = pneg %p40
        %p214 = pneg %p37
        %s215 = smul.u32 8, %s19
        %s216 = ssub.s32 25, %s215
        %p217 = scmp.lt.s32.totalorder %s216, 8
        %s218 = scalar_select %p217, %s216, 8
        %s219 = smul.u32 128, %s218
        %p220 = scmp.lt.s32.totalorder %s215, 24
        %s221 = scalar_select %p220, %s215, 24
        %s222 = smul.addr %s221, 8
        %s223 = scalar_lea.vmem %s1, %s222
        %p224 = pneg %p66
        %p225 = pneg %p63
        %p226 = pneg %p92
        %p227 = pneg %p89
        %s228 = sand.u32 %s79, 1
        %s229 = sand.u32 %s79, 1
        %s230 = smul.addr %s229, 64
        %s231 = scalar_lea.vmem [#allocation2], %s230
        %p232 = pneg %p118
        %p233 = pneg %p115
        %s234 = sand.u32 %s105, 1
        %s235 = scalar_lea.sflag [#allocation4], %s234
        %s236 = sand.u32 %s105, 1
        %s237 = scalar_lea.vmem [#allocation3], %s236
        %p238 = pneg %p144
        %p239 = pneg %p141
        %p240 = scmp.lt.s32.totalorder %s19, 3
        %s241 = scalar_select %p240, %s19, 3
        %s242 = scalar_lea.vmem %s4, %s241
        %s243 = smul.u32 8, %s19
        %s244 = ssub.s32 25, %s243
        %p245 = scmp.lt.s32.totalorder %s244, 8
        %s246 = scalar_select %p245, %s244, 8
        %s247 = smul.u32 128, %s246
        %p248 = scmp.lt.s32.totalorder %s243, 24
        %s249 = scalar_select %p248, %s243, 24
        %s250 = smul.addr %s249, 8
        %s251 = scalar_lea.vmem %s0, %s250
        %s252 = smul.u32 8, %s19
        %s253 = ssub.s32 25, %s252
        %p254 = scmp.lt.s32.totalorder %s253, 8
        %s255 = scalar_select %p254, %s253, 8
        %s256 = smul.u32 128, %s255
        %s257 = smul.u32 8, %s19
        %s258 = ssub.s32 25, %s257
        %p259 = scmp.lt.s32.totalorder %s258, 8
        %s260 = scalar_select %p259, %s258, 8
        %s261 = smul.u32 128, %s260
        %p262 = scmp.lt.s32.totalorder %s257, 24
        %s263 = scalar_select %p262, %s257, 24
        %s264 = smul.addr %s263, 8
        %s265 = scalar_lea.vmem %s1, %s264
        %s266 = smul.u32 8, %s19
        %s267 = ssub.s32 25, %s266
        %p268 = scmp.lt.s32.totalorder %s267, 8
        %s269 = scalar_select %p268, %s267, 8
        %s270 = smul.u32 128, %s269
        %s271 = smul.u32 8, %s19
        %s272 = ssub.s32 25, %s271
        %p273 = scmp.lt.s32.totalorder %s272, 8
        %s274 = scalar_select %p273, %s272, 8
        %s275 = smul.u32 128, %s274
        %p276 = scmp.lt.s32.totalorder %s19, 3
        %s277 = scalar_select %p276, %s19, 3
        %s278 = scalar_lea.vmem %s4, %s277
        %p279 = scmp.ne.s32.totalorder %s19, 3
        // Predicated region
        $region29: #{tpu_custom_call.1} parent=27 // pred_check
          %p280 = pneg %p279
        $region30: #{tpu_custom_call.1} parent=27 // pred_check_branch
          %282 = sbr.rel (%p280) target = $region32
        $region31: #{tpu_custom_call.1} parent=27 // pred_region
          %v283 = vld [vmem:[%s251] sm:$0xff]
          %v284 = vld [vmem:[%s251 + $0x8] sm:$0xff]
          %v285 = vld [vmem:[%s251 + $0x10] sm:$0xff]
          %v286 = vld [vmem:[%s251 + $0x18] sm:$0xff]
          %v287 = vld [vmem:[%s251 + $0x20] sm:$0xff]
          %v288 = vld [vmem:[%s251 + $0x28] sm:$0xff]
          %v289 = vld [vmem:[%s251 + $0x30] sm:$0xff]
          %v290 = vld [vmem:[%s251 + $0x38] sm:$0xff]
          %v291 = vld [vmem:[%s265] sm:$0xff]
          %v292 = vld [vmem:[%s265 + $0x8] sm:$0xff]
          %v293 = vld [vmem:[%s265 + $0x10] sm:$0xff]
          %v294 = vld [vmem:[%s265 + $0x18] sm:$0xff]
          %v295 = vld [vmem:[%s265 + $0x20] sm:$0xff]
          %v296 = vld [vmem:[%s265 + $0x28] sm:$0xff]
          %v297 = vld [vmem:[%s265 + $0x30] sm:$0xff]
          %v298 = vld [vmem:[%s265 + $0x38] sm:$0xff]
          %v299 = vmul.f32 %v283, %v283
          %v300 = vmul.f32 %v284, %v284
          %v301 = vmul.f32 %v285, %v285
          %v302 = vmul.f32 %v286, %v286
          %v303 = vmul.f32 %v287, %v287
          %v304 = vmul.f32 %v288, %v288
          %v305 = vmul.f32 %v289, %v289
          %v306 = vmul.f32 %v290, %v290
          %v307 = vmul.f32 %v299, %v283
          %v308 = vmul.f32 %v300, %v284
          %v309 = vmul.f32 %v301, %v285
          %v310 = vmul.f32 %v302, %v286
          %v311 = vmul.f32 %v303, %v287
          %v312 = vmul.f32 %v304, %v288
          %v313 = vmul.f32 %v305, %v289
          %v314 = vmul.f32 %v306, %v290
          %323 = vrot.lane.b32.xlu0 %v283, 1
          %v324 = vpop.permute.xlu0 %323
          %325 = vrot.lane.b32.xlu0 %v284, 1
          %v326 = vpop.permute.xlu0 %325
          %327 = vrot.lane.b32.xlu0 %v285, 1
          %v328 = vpop.permute.xlu0 %327
          %329 = vrot.lane.b32.xlu0 %v286, 1
          %v330 = vpop.permute.xlu0 %329
          %331 = vrot.lane.b32.xlu0 %v287, 1
          %v332 = vpop.permute.xlu0 %331
          %333 = vrot.lane.b32.xlu0 %v288, 1
          %v334 = vpop.permute.xlu0 %333
          %335 = vrot.lane.b32.xlu0 %v289, 1
          %v336 = vpop.permute.xlu0 %335
          %337 = vrot.lane.b32.xlu0 %v290, 1
          %v338 = vpop.permute.xlu0 %337
          %355 = vrot.lane.b32.xlu0 %v299, 2
          %v356 = vpop.permute.xlu0 %355
          %357 = vrot.lane.b32.xlu0 %v300, 2
          %v358 = vpop.permute.xlu0 %357
          %359 = vrot.lane.b32.xlu0 %v301, 2
          %v360 = vpop.permute.xlu0 %359
          %361 = vrot.lane.b32.xlu0 %v302, 2
          %v362 = vpop.permute.xlu0 %361
          %363 = vrot.lane.b32.xlu0 %v303, 2
          %v364 = vpop.permute.xlu0 %363
          %365 = vrot.lane.b32.xlu0 %v304, 2
          %v366 = vpop.permute.xlu0 %365
          %367 = vrot.lane.b32.xlu0 %v305, 2
          %v368 = vpop.permute.xlu0 %367
          %369 = vrot.lane.b32.xlu0 %v306, 2
          %v370 = vpop.permute.xlu0 %369
          %387 = vrot.lane.b32.xlu0 %v307, 3
          %v388 = vpop.permute.xlu0 %387
          %389 = vrot.lane.b32.xlu0 %v308, 3
          %v390 = vpop.permute.xlu0 %389
          %391 = vrot.lane.b32.xlu0 %v309, 3
          %v392 = vpop.permute.xlu0 %391
          %393 = vrot.lane.b32.xlu0 %v310, 3
          %v394 = vpop.permute.xlu0 %393
          %395 = vrot.lane.b32.xlu0 %v311, 3
          %v396 = vpop.permute.xlu0 %395
          %397 = vrot.lane.b32.xlu0 %v312, 3
          %v398 = vpop.permute.xlu0 %397
          %399 = vrot.lane.b32.xlu0 %v313, 3
          %v400 = vpop.permute.xlu0 %399
          %401 = vrot.lane.b32.xlu0 %v314, 3
          %v402 = vpop.permute.xlu0 %401
          %419 = vrot.lane.b32.xlu0 %v291, 4
          %v420 = vpop.permute.xlu0 %419
          %421 = vrot.lane.b32.xlu0 %v292, 4
          %v422 = vpop.permute.xlu0 %421
          %423 = vrot.lane.b32.xlu0 %v293, 4
          %v424 = vpop.permute.xlu0 %423
          %425 = vrot.lane.b32.xlu0 %v294, 4
          %v426 = vpop.permute.xlu0 %425
          %427 = vrot.lane.b32.xlu0 %v295, 4
          %v428 = vpop.permute.xlu0 %427
          %429 = vrot.lane.b32.xlu0 %v296, 4
          %v430 = vpop.permute.xlu0 %429
          %431 = vrot.lane.b32.xlu0 %v297, 4
          %v432 = vpop.permute.xlu0 %431
          %433 = vrot.lane.b32.xlu0 %v298, 4
          %v434 = vpop.permute.xlu0 %433
          %vm443 = vcmask 7168
          %v444 = vsel %vm443, 1.0, %v324
          %v445 = vsel %vm443, 1.0, %v326
          %v446 = vsel %vm443, 1.0, %v328
          %v447 = vsel %vm443, 1.0, %v330
          %v448 = vsel %vm443, 1.0, %v332
          %v449 = vsel %vm443, 1.0, %v334
          %v450 = vsel %vm443, 1.0, %v336
          %v451 = vsel %vm443, 1.0, %v338
          %vm452 = vcmask 15360
          %v453 = vsel %vm452, %v444, %v356
          %v454 = vsel %vm452, %v445, %v358
          %v455 = vsel %vm452, %v446, %v360
          %v456 = vsel %vm452, %v447, %v362
          %v457 = vsel %vm452, %v448, %v364
          %v458 = vsel %vm452, %v449, %v366
          %v459 = vsel %vm452, %v450, %v368
          %v460 = vsel %vm452, %v451, %v370
          %vm461 = vcmask 23552
          %v462 = vsel %vm461, %v453, %v388
          %v463 = vsel %vm461, %v454, %v390
          %v464 = vsel %vm461, %v455, %v392
          %v465 = vsel %vm461, %v456, %v394
          %v466 = vsel %vm461, %v457, %v396
          %v467 = vsel %vm461, %v458, %v398
          %v468 = vsel %vm461, %v459, %v400
          %v469 = vsel %vm461, %v460, %v402
          %vm470 = vcmask 31744
          %v471 = vsel %vm470, %v462, %v420
          %v472 = vsel %vm470, %v463, %v422
          %v473 = vsel %vm470, %v464, %v424
          %v474 = vsel %vm470, %v465, %v426
          %v475 = vsel %vm470, %v466, %v428
          %v476 = vsel %vm470, %v467, %v430
          %v477 = vsel %vm470, %v468, %v432
          %v478 = vsel %vm470, %v469, %v434
          %vm479 = vcmask 56320
          %480 = vst.msk [vmem:[%s231] sm:$0xff] %vm479, %v471
          %481 = vst.msk [vmem:[%s231 + $0x8] sm:$0xff] %vm479, %v472
          %482 = vst.msk [vmem:[%s231 + $0x10] sm:$0xff] %vm479, %v473
          %483 = vst.msk [vmem:[%s231 + $0x18] sm:$0xff] %vm479, %v474
          %484 = vst.msk [vmem:[%s231 + $0x20] sm:$0xff] %vm479, %v475
          %485 = vst.msk [vmem:[%s231 + $0x28] sm:$0xff] %vm479, %v476
          %486 = vst.msk [vmem:[%s231 + $0x30] sm:$0xff] %vm479, %v477
          %487 = vst.msk [vmem:[%s231 + $0x38] sm:$0xff] %vm479, %v478
          %v488 = vmul.f32 %v471, %v471
          %v489 = vmul.f32 %v472, %v472
          %v490 = vmul.f32 %v473, %v473
          %v491 = vmul.f32 %v474, %v474
          %v492 = vmul.f32 %v475, %v475
          %v493 = vmul.f32 %v476, %v476
          %v494 = vmul.f32 %v477, %v477
          %v495 = vmul.f32 %v478, %v478
          %v496 = vsel %vm479, %v488, 0.0
          %v497 = vsel %vm479, %v489, 0.0
          %v498 = vadd.f32 %v496, %v497
          %v499 = vsel %vm479, %v490, 0.0
          %v500 = vadd.f32 %v498, %v499
          %v501 = vsel %vm479, %v491, 0.0
          %v502 = vadd.f32 %v500, %v501
          %v503 = vsel %vm479, %v492, 0.0
          %v504 = vadd.f32 %v502, %v503
          %v505 = vsel %vm479, %v493, 0.0
          %v506 = vadd.f32 %v504, %v505
          %v507 = vsel %vm479, %v494, 0.0
          %v508 = vadd.f32 %v506, %v507
          %v509 = vsel %vm479, %v495, 0.0
          %v510 = vadd.f32 %v508, %v509
          %v511 = vrot.slane %v510, 4
          %v512 = vadd.f32 %v510, %v511
          %v513 = vrot.slane %v512, 2
          %v514 = vadd.f32 %v512, %v513
          %v515 = vrot.slane %v514, 1
          %v516 = vadd.f32 %v514, %v515
          %vm517 = vcmask 49152
          %518 = vst.msk [vmem:[%s237] sm:$0x1] %vm517, %v516
          %v519 = vsel %vm443, %v299, 0.0
          %v520 = vsel %vm443, %v300, 0.0
          %v521 = vadd.f32 %v519, %v520
          %v522 = vsel %vm443, %v301, 0.0
          %v523 = vadd.f32 %v521, %v522
          %v524 = vsel %vm443, %v302, 0.0
          %v525 = vadd.f32 %v523, %v524
          %v526 = vsel %vm443, %v303, 0.0
          %v527 = vadd.f32 %v525, %v526
          %v528 = vsel %vm443, %v304, 0.0
          %v529 = vadd.f32 %v527, %v528
          %v530 = vsel %vm443, %v305, 0.0
          %v531 = vadd.f32 %v529, %v530
          %v532 = vsel %vm443, %v306, 0.0
          %v533 = vadd.f32 %v531, %v532
          %v534 = vrot.slane %v533, 4
          %v535 = vadd.f32 %v533, %v534
          %v536 = vrot.slane %v535, 2
          %v537 = vadd.f32 %v535, %v536
          %v538 = vrot.slane %v537, 1
          %v539 = vadd.f32 %v537, %v538
          %vm540 = vcmask 0
          %541 = vst.msk [vmem:[%s278] sm:$0x1] %vm540, %v539
        $region32: #{tpu_custom_call.1} parent=27 // pred_fallthru
          _
        %p542 = scmp.eq.s32.totalorder %s19, 3
        // Predicated region
        $region33: #{tpu_custom_call.1} parent=27 // pred_check
          %p543 = pneg %p542
        $region34: #{tpu_custom_call.1} parent=27 // pred_check_branch
          %545 = sbr.rel (%p543) target = $region36
        $region35: #{tpu_custom_call.1} parent=27 // pred_region
          %v546 = vld [vmem:[%s251] sm:$0xff]
          %v547 = vld [vmem:[%s251 + $0x8] sm:$0xff]
          %v548 = vld [vmem:[%s251 + $0x10] sm:$0xff]
          %v549 = vld [vmem:[%s251 + $0x18] sm:$0xff]
          %v550 = vld [vmem:[%s251 + $0x20] sm:$0xff]
          %v551 = vld [vmem:[%s251 + $0x28] sm:$0xff]
          %v552 = vld [vmem:[%s251 + $0x30] sm:$0xff]
          %v553 = vld [vmem:[%s251 + $0x38] sm:$0xff]
          %v554 = vld [vmem:[%s265] sm:$0xff]
          %v555 = vld [vmem:[%s265 + $0x8] sm:$0xff]
          %v556 = vld [vmem:[%s265 + $0x10] sm:$0xff]
          %v557 = vld [vmem:[%s265 + $0x18] sm:$0xff]
          %v558 = vld [vmem:[%s265 + $0x20] sm:$0xff]
          %v559 = vld [vmem:[%s265 + $0x28] sm:$0xff]
          %v560 = vld [vmem:[%s265 + $0x30] sm:$0xff]
          %v561 = vld [vmem:[%s265 + $0x38] sm:$0xff]
          %v562 = vmul.f32 %v546, %v546
          %v563 = vmul.f32 %v547, %v547
          %v564 = vmul.f32 %v548, %v548
          %v565 = vmul.f32 %v549, %v549
          %v566 = vmul.f32 %v550, %v550
          %v567 = vmul.f32 %v551, %v551
          %v568 = vmul.f32 %v552, %v552
          %v569 = vmul.f32 %v553, %v553
          %v570 = vmul.f32 %v562, %v546
          %v571 = vmul.f32 %v563, %v547
          %v572 = vmul.f32 %v564, %v548
          %v573 = vmul.f32 %v565, %v549
          %v574 = vmul.f32 %v566, %v550
          %v575 = vmul.f32 %v567, %v551
          %v576 = vmul.f32 %v568, %v552
          %v577 = vmul.f32 %v569, %v553
          %586 = vrot.lane.b32.xlu0 %v546, 1
          %v587 = vpop.permute.xlu0 %586
          %588 = vrot.lane.b32.xlu0 %v547, 1
          %v589 = vpop.permute.xlu0 %588
          %590 = vrot.lane.b32.xlu0 %v548, 1
          %v591 = vpop.permute.xlu0 %590
          %592 = vrot.lane.b32.xlu0 %v549, 1
          %v593 = vpop.permute.xlu0 %592
          %594 = vrot.lane.b32.xlu0 %v550, 1
          %v595 = vpop.permute.xlu0 %594
          %596 = vrot.lane.b32.xlu0 %v551, 1
          %v597 = vpop.permute.xlu0 %596
          %598 = vrot.lane.b32.xlu0 %v552, 1
          %v599 = vpop.permute.xlu0 %598
          %600 = vrot.lane.b32.xlu0 %v553, 1
          %v601 = vpop.permute.xlu0 %600
          %618 = vrot.lane.b32.xlu0 %v562, 2
          %v619 = vpop.permute.xlu0 %618
          %620 = vrot.lane.b32.xlu0 %v563, 2
          %v621 = vpop.permute.xlu0 %620
          %622 = vrot.lane.b32.xlu0 %v564, 2
          %v623 = vpop.permute.xlu0 %622
          %624 = vrot.lane.b32.xlu0 %v565, 2
          %v625 = vpop.permute.xlu0 %624
          %626 = vrot.lane.b32.xlu0 %v566, 2
          %v627 = vpop.permute.xlu0 %626
          %628 = vrot.lane.b32.xlu0 %v567, 2
          %v629 = vpop.permute.xlu0 %628
          %630 = vrot.lane.b32.xlu0 %v568, 2
          %v631 = vpop.permute.xlu0 %630
          %632 = vrot.lane.b32.xlu0 %v569, 2
          %v633 = vpop.permute.xlu0 %632
          %650 = vrot.lane.b32.xlu0 %v570, 3
          %v651 = vpop.permute.xlu0 %650
          %652 = vrot.lane.b32.xlu0 %v571, 3
          %v653 = vpop.permute.xlu0 %652
          %654 = vrot.lane.b32.xlu0 %v572, 3
          %v655 = vpop.permute.xlu0 %654
          %656 = vrot.lane.b32.xlu0 %v573, 3
          %v657 = vpop.permute.xlu0 %656
          %658 = vrot.lane.b32.xlu0 %v574, 3
          %v659 = vpop.permute.xlu0 %658
          %660 = vrot.lane.b32.xlu0 %v575, 3
          %v661 = vpop.permute.xlu0 %660
          %662 = vrot.lane.b32.xlu0 %v576, 3
          %v663 = vpop.permute.xlu0 %662
          %664 = vrot.lane.b32.xlu0 %v577, 3
          %v665 = vpop.permute.xlu0 %664
          %682 = vrot.lane.b32.xlu0 %v554, 4
          %v683 = vpop.permute.xlu0 %682
          %684 = vrot.lane.b32.xlu0 %v555, 4
          %v685 = vpop.permute.xlu0 %684
          %686 = vrot.lane.b32.xlu0 %v556, 4
          %v687 = vpop.permute.xlu0 %686
          %688 = vrot.lane.b32.xlu0 %v557, 4
          %v689 = vpop.permute.xlu0 %688
          %690 = vrot.lane.b32.xlu0 %v558, 4
          %v691 = vpop.permute.xlu0 %690
          %692 = vrot.lane.b32.xlu0 %v559, 4
          %v693 = vpop.permute.xlu0 %692
          %694 = vrot.lane.b32.xlu0 %v560, 4
          %v695 = vpop.permute.xlu0 %694
          %696 = vrot.lane.b32.xlu0 %v561, 4
          %v697 = vpop.permute.xlu0 %696
          %vm706 = vcmask 7168
          %v707 = vsel %vm706, 1.0, %v587
          %v708 = vsel %vm706, 1.0, %v589
          %v709 = vsel %vm706, 1.0, %v591
          %v710 = vsel %vm706, 1.0, %v593
          %v711 = vsel %vm706, 1.0, %v595
          %v712 = vsel %vm706, 1.0, %v597
          %v713 = vsel %vm706, 1.0, %v599
          %v714 = vsel %vm706, 1.0, %v601
          %vm715 = vcmask 15360
          %v716 = vsel %vm715, %v707, %v619
          %v717 = vsel %vm715, %v708, %v621
          %v718 = vsel %vm715, %v709, %v623
          %v719 = vsel %vm715, %v710, %v625
          %v720 = vsel %vm715, %v711, %v627
          %v721 = vsel %vm715, %v712, %v629
          %v722 = vsel %vm715, %v713, %v631
          %v723 = vsel %vm715, %v714, %v633
          %vm724 = vcmask 23552
          %v725 = vsel %vm724, %v716, %v651
          %v726 = vsel %vm724, %v717, %v653
          %v727 = vsel %vm724, %v718, %v655
          %v728 = vsel %vm724, %v719, %v657
          %v729 = vsel %vm724, %v720, %v659
          %v730 = vsel %vm724, %v721, %v661
          %v731 = vsel %vm724, %v722, %v663
          %v732 = vsel %vm724, %v723, %v665
          %vm733 = vcmask 31744
          %v734 = vsel %vm733, %v725, %v683
          %v735 = vsel %vm733, %v726, %v685
          %v736 = vsel %vm733, %v727, %v687
          %v737 = vsel %vm733, %v728, %v689
          %v738 = vsel %vm733, %v729, %v691
          %v739 = vsel %vm733, %v730, %v693
          %v740 = vsel %vm733, %v731, %v695
          %v741 = vsel %vm733, %v732, %v697
          %vm742 = vcmask 56320
          %743 = vst.msk [vmem:[%s231] sm:$0xff] %vm742, %v734
          %744 = vst.msk [vmem:[%s231 + $0x8] sm:$0xff] %vm742, %v735
          %745 = vst.msk [vmem:[%s231 + $0x10] sm:$0xff] %vm742, %v736
          %746 = vst.msk [vmem:[%s231 + $0x18] sm:$0xff] %vm742, %v737
          %747 = vst.msk [vmem:[%s231 + $0x20] sm:$0xff] %vm742, %v738
          %748 = vst.msk [vmem:[%s231 + $0x28] sm:$0xff] %vm742, %v739
          %749 = vst.msk [vmem:[%s231 + $0x30] sm:$0xff] %vm742, %v740
          %750 = vst.msk [vmem:[%s231 + $0x38] sm:$0xff] %vm742, %v741
          %s751 = smul.u32 %s19, 64
          %v752 = vlaneseq
          %v753 = vshrl.u32 %v752, 7
          %v754 = vadd.s32 %v753, 8
          %v755 = vadd.s32 %v753, 16
          %v756 = vadd.s32 %v753, 24
          %v757 = vadd.s32 %v753, 32
          %v758 = vadd.s32 %v753, 40
          %v759 = vadd.s32 %v753, 48
          %v760 = vadd.s32 %v753, 56
          %v761 = vstv %s751
          %v762 = vadd.s32 %v761, %v753
          %v763 = vadd.s32 %v761, %v754
          %v764 = vadd.s32 %v761, %v755
          %v765 = vadd.s32 %v761, %v756
          %v766 = vadd.s32 %v761, %v757
          %v767 = vadd.s32 %v761, %v758
          %v768 = vadd.s32 %v761, %v759
          %v769 = vadd.s32 %v761, %v760
          %vm770 = vcmp.lt.s32.totalorder %v762, 200
          %vm771 = vcmp.lt.s32.totalorder %v763, 200
          %vm772 = vcmp.lt.s32.totalorder %v764, 200
          %vm773 = vcmp.lt.s32.totalorder %v765, 200
          %vm774 = vcmp.lt.s32.totalorder %v766, 200
          %vm775 = vcmp.lt.s32.totalorder %v767, 200
          %vm776 = vcmp.lt.s32.totalorder %v768, 200
          %vm777 = vcmp.lt.s32.totalorder %v769, 200
          %v778 = vsel %vm770, 1, 0
          %v779 = vsel %vm771, 1, 0
          %v780 = vsel %vm772, 1, 0
          %v781 = vsel %vm773, 1, 0
          %v782 = vsel %vm774, 1, 0
          %v783 = vsel %vm775, 1, 0
          %v784 = vsel %vm776, 1, 0
          %v785 = vsel %vm777, 1, 0
          %vm786 = vcmp.eq.s32.totalorder %v778, 1
          %vm787 = vcmp.eq.s32.totalorder %v779, 1
          %vm788 = vcmp.eq.s32.totalorder %v780, 1
          %vm789 = vcmp.eq.s32.totalorder %v781, 1
          %vm790 = vcmp.eq.s32.totalorder %v782, 1
          %vm791 = vcmp.eq.s32.totalorder %v783, 1
          %vm792 = vcmp.eq.s32.totalorder %v784, 1
          %vm793 = vcmp.eq.s32.totalorder %v785, 1
          %v794 = vsel %vm786, %v734, 0.0
          %v795 = vsel %vm787, %v735, 0.0
          %v796 = vsel %vm788, %v736, 0.0
          %v797 = vsel %vm789, %v737, 0.0
          %v798 = vsel %vm790, %v738, 0.0
          %v799 = vsel %vm791, %v739, 0.0
          %v800 = vsel %vm792, %v740, 0.0
          %v801 = vsel %vm793, %v741, 0.0
          %v802 = vsel %vm770, %v562, 0.0
          %v803 = vsel %vm771, %v563, 0.0
          %v804 = vsel %vm772, %v564, 0.0
          %v805 = vsel %vm773, %v565, 0.0
          %v806 = vsel %vm774, %v566, 0.0
          %v807 = vsel %vm775, %v567, 0.0
          %v808 = vsel %vm776, %v568, 0.0
          %v809 = vsel %vm777, %v569, 0.0
          %v810 = vmul.f32 %v794, %v794
          %v811 = vmul.f32 %v795, %v795
          %v812 = vmul.f32 %v796, %v796
          %v813 = vmul.f32 %v797, %v797
          %v814 = vmul.f32 %v798, %v798
          %v815 = vmul.f32 %v799, %v799
          %v816 = vmul.f32 %v800, %v800
          %v817 = vmul.f32 %v801, %v801
          %v818 = vsel %vm742, %v810, 0.0
          %v819 = vsel %vm742, %v811, 0.0
          %v820 = vadd.f32 %v818, %v819
          %v821 = vsel %vm742, %v812, 0.0
          %v822 = vadd.f32 %v820, %v821
          %v823 = vsel %vm742, %v813, 0.0
          %v824 = vadd.f32 %v822, %v823
          %v825 = vsel %vm742, %v814, 0.0
          %v826 = vadd.f32 %v824, %v825
          %v827 = vsel %vm742, %v815, 0.0
          %v828 = vadd.f32 %v826, %v827
          %v829 = vsel %vm742, %v816, 0.0
          %v830 = vadd.f32 %v828, %v829
          %v831 = vsel %vm742, %v817, 0.0
          %v832 = vadd.f32 %v830, %v831
          %v833 = vrot.slane %v832, 4
          %v834 = vadd.f32 %v832, %v833
          %v835 = vrot.slane %v834, 2
          %v836 = vadd.f32 %v834, %v835
          %v837 = vrot.slane %v836, 1
          %v838 = vadd.f32 %v836, %v837
          %vm839 = vcmask 49152
          %840 = vst.msk [vmem:[%s237] sm:$0x1] %vm839, %v838
          %v841 = vsel %vm706, %v802, 0.0
          %v842 = vsel %vm706, %v803, 0.0
          %v843 = vadd.f32 %v841, %v842
          %v844 = vsel %vm706, %v804, 0.0
          %v845 = vadd.f32 %v843, %v844
          %v846 = vsel %vm706, %v805, 0.0
          %v847 = vadd.f32 %v845, %v846
          %v848 = vsel %vm706, %v806, 0.0
          %v849 = vadd.f32 %v847, %v848
          %v850 = vsel %vm706, %v807, 0.0
          %v851 = vadd.f32 %v849, %v850
          %v852 = vsel %vm706, %v808, 0.0
          %v853 = vadd.f32 %v851, %v852
          %v854 = vsel %vm706, %v809, 0.0
          %v855 = vadd.f32 %v853, %v854
          %v856 = vrot.slane %v855, 4
          %v857 = vadd.f32 %v855, %v856
          %v858 = vrot.slane %v857, 2
          %v859 = vadd.f32 %v857, %v858
          %v860 = vrot.slane %v859, 1
          %v861 = vadd.f32 %v859, %v860
          %vm862 = vcmask 0
          %863 = vst.msk [vmem:[%s278] sm:$0x1] %vm862, %v861
        $region36: #{tpu_custom_call.1} parent=27 // pred_fallthru
          _
        %s864 = sand.u32 %s79, 1
        %s865 = sand.u32 %s79, 1
        %s866 = smul.addr %s865, 64
        %s867 = scalar_lea.vmem [#allocation2], %s866
        %s868 = sand.u32 %s105, 1
        %s869 = scalar_lea.sflag [#allocation4], %s868
        %s870 = sand.u32 %s105, 1
        %s871 = scalar_lea.vmem [#allocation3], %s870
        %p872 = scmp.lt.s32.totalorder %s19, 3
        %s873 = scalar_select %p872, %s19, 3
        %s874 = scalar_lea.vmem %s4, %s873
        // Predicated region
        $region37: #{tpu_custom_call.1} parent=27 // pred_check
          %p875 = pneg %p89
        $region38: #{tpu_custom_call.1} parent=27 // pred_check_branch
          %877 = sbr.rel (%p875) target = $region40
        $region39: #{tpu_custom_call.1} parent=27 // pred_region
          %s878 = smul.u32 8, %s19
          %s879 = ssub.s32 25, %s878
          %p880 = scmp.lt.s32.totalorder %s879, 8
          %s881 = scalar_select %p880, %s879, 8
          %s882 = smul.u32 128, %s881
          %p883 = scmp.ne.s32.totalorder 0, %s882
          %s884 = smul.addr %s878, 8
          %s885 = scalar_lea.vmem %s2, %s884
          // Predicated region
          $region41: #{tpu_custom_call.1} parent=39 // pred_check
            %p886 = pneg %p883
          $region42: #{tpu_custom_call.1} parent=39 // pred_check_branch
            %888 = sbr.rel (%p886) target = $region44
          $region43: #{tpu_custom_call.1} parent=39 // pred_region
            // Predicated region
            $region45: #{tpu_custom_call.1} parent=43 // pred_check
              _
            $region46: #{tpu_custom_call.1} parent=43 // pred_check_branch
              %890 = sbr.rel (0) target = $region48
            $region47: #{tpu_custom_call.1} parent=43 // pred_region
              // Predicated region
              $region67: #{tpu_custom_call.1} parent=47 // pred_check
                _
              $region68: #{tpu_custom_call.1} parent=47 // pred_check_branch
                %953 = sbr.rel (0) target = $region70
              $region69: #{tpu_custom_call.1} parent=47 // pred_region
                %s954 = sshrl.u32 %s881, 3
                // While loop
                $region71: #{tpu_custom_call.1} parent=69 // loop_pre_header
                  _
                $region72: #{tpu_custom_call.1} parent=69 // loop_header
                  %s956 = sphi 0, %s958
                  %p957 = scmp.ge.s32.totalorder %s956, %s954
                  %s961 = sphi 0, %s982
                  %s962 = sphi %s867, %s985
                  %s963 = sphi %s885, %s986
                $region73: #{tpu_custom_call.1} parent=69 // loop_header_branch
                  %960 = sbr.rel (%p957) target = $region77
                $region74: #{tpu_custom_call.1} parent=69 // loop_body
                  %v964 = vld [vmem:[%s962] sm:$0xff]
                  %965 = vst [vmem:[%s963] sm:$0xff] %v964
                  %v966 = vld [vmem:[%s962 + $0x8] sm:$0xff]
                  %967 = vst [vmem:[%s963 + $0x8] sm:$0xff] %v966
                  %v968 = vld [vmem:[%s962 + $0x10] sm:$0xff]
                  %969 = vst [vmem:[%s963 + $0x10] sm:$0xff] %v968
                  %v970 = vld [vmem:[%s962 + $0x18] sm:$0xff]
                  %971 = vst [vmem:[%s963 + $0x18] sm:$0xff] %v970
                  %v972 = vld [vmem:[%s962 + $0x20] sm:$0xff]
                  %973 = vst [vmem:[%s963 + $0x20] sm:$0xff] %v972
                  %v974 = vld [vmem:[%s962 + $0x28] sm:$0xff]
                  %975 = vst [vmem:[%s963 + $0x28] sm:$0xff] %v974
                  %v976 = vld [vmem:[%s962 + $0x30] sm:$0xff]
                  %977 = vst [vmem:[%s963 + $0x30] sm:$0xff] %v976
                  %v978 = vld [vmem:[%s962 + $0x38] sm:$0xff]
                  %979 = vst [vmem:[%s963 + $0x38] sm:$0xff] %v978
                  %s980 = sadd.s32 1, %s961
                  %p981 = scmp.ge.s32.totalorder %s980, %s954
                  %s982 = scalar_select %p981, 0, %s980
                  %s983 = smul.u32 %s982, 64
                  %s984 = smul.u32 %s982, 64
                  %s985 = scalar_lea.vmem %s867, %s983 [#allocation2]
                  %s986 = scalar_lea.vmem %s885, %s984
                $region75: #{tpu_custom_call.1} parent=69 // loop_footer
                  %s958 = sadd.s32 %s956, 1
                $region76: #{tpu_custom_call.1} parent=69 // loop_footer_branch
                  %955 = sbr.rel target = $region72
                $region77: #{tpu_custom_call.1} parent=69 // loop_exit
                  _
                %s987 = sshrl.u32 %s881, 3
                %s988 = sand.u32 %s881, 7
                %s989 = smul.u32 %s987, 8
                %s990 = smul.u32 8, %s989
                %s991 = scalar_lea.vmem %s867, %s990 [#allocation2]
                %s992 = smul.u32 8, %s989
                %s993 = scalar_lea.vmem %s885, %s992
                // While loop
                $region78: #{tpu_custom_call.1} parent=69 // loop_pre_header
                  _
                $region79: #{tpu_custom_call.1} parent=69 // loop_header
                  %s995 = sphi 0, %s997
                  %p996 = scmp.ge.s32.totalorder %s995, %s988
                  %s1000 = sphi 0, %s1007
                  %s1001 = sphi %s991, %s1010
                  %s1002 = sphi %s993, %s1011
                $region80: #{tpu_custom_call.1} parent=69 // loop_header_branch
                  %999 = sbr.rel (%p996) target = $region84
                $region81: #{tpu_custom_call.1} parent=69 // loop_body
                  %v1003 = vld [vmem:[%s1001] sm:$0xff]
                  %1004 = vst [vmem:[%s1002] sm:$0xff] %v1003
                  %s1005 = sadd.s32 1, %s1000
                  %p1006 = scmp.ge.s32.totalorder %s1005, %s988
                  %s1007 = scalar_select %p1006, 0, %s1005
                  %s1008 = smul.u32 %s1007, 8
                  %s1009 = smul.u32 %s1007, 8
                  %s1010 = scalar_lea.vmem %s991, %s1008 [#allocation2]
                  %s1011 = scalar_lea.vmem %s993, %s1009
                $region82: #{tpu_custom_call.1} parent=69 // loop_footer
                  %s997 = sadd.s32 %s995, 1
                $region83: #{tpu_custom_call.1} parent=69 // loop_footer_branch
                  %994 = sbr.rel target = $region79
                $region84: #{tpu_custom_call.1} parent=69 // loop_exit
                  _
              $region70: #{tpu_custom_call.1} parent=47 // pred_fallthru
                _
              // Predicated region
              $region85: #{tpu_custom_call.1} parent=47 // pred_check
                _
              $region86: #{tpu_custom_call.1} parent=47 // pred_check_branch
                %1013 = sbr.rel target = $region88
              $region87: #{tpu_custom_call.1} parent=47 // pred_region
                _
              $region88: #{tpu_custom_call.1} parent=47 // pred_fallthru
                _
            $region48: #{tpu_custom_call.1} parent=43 // pred_fallthru
              _
            // Predicated region
            $region49: #{tpu_custom_call.1} parent=43 // pred_check
              _
            $region50: #{tpu_custom_call.1} parent=43 // pred_check_branch
              %892 = sbr.rel target = $region52
            $region51: #{tpu_custom_call.1} parent=43 // pred_region
              %s894 = sshrl.u32 %s881, 3
              // While loop
              $region53: #{tpu_custom_call.1} parent=51 // loop_pre_header
                _
              $region54: #{tpu_custom_call.1} parent=51 // loop_header
                %s896 = sphi 0, %s898
                %p897 = scmp.ge.s32.totalorder %s896, %s894
                %s901 = sphi 0, %s922
                %s902 = sphi %s867, %s925
                %s903 = sphi %s885, %s926
              $region55: #{tpu_custom_call.1} parent=51 // loop_header_branch
                %900 = sbr.rel (%p897) target = $region59
              $region56: #{tpu_custom_call.1} parent=51 // loop_body
                %v904 = vld [vmem:[%s902] sm:$0xff]
                %905 = vst [vmem:[%s903] sm:$0xff] %v904
                %v906 = vld [vmem:[%s902 + $0x8] sm:$0xff]
                %907 = vst [vmem:[%s903 + $0x8] sm:$0xff] %v906
                %v908 = vld [vmem:[%s902 + $0x10] sm:$0xff]
                %909 = vst [vmem:[%s903 + $0x10] sm:$0xff] %v908
                %v910 = vld [vmem:[%s902 + $0x18] sm:$0xff]
                %911 = vst [vmem:[%s903 + $0x18] sm:$0xff] %v910
                %v912 = vld [vmem:[%s902 + $0x20] sm:$0xff]
                %913 = vst [vmem:[%s903 + $0x20] sm:$0xff] %v912
                %v914 = vld [vmem:[%s902 + $0x28] sm:$0xff]
                %915 = vst [vmem:[%s903 + $0x28] sm:$0xff] %v914
                %v916 = vld [vmem:[%s902 + $0x30] sm:$0xff]
                %917 = vst [vmem:[%s903 + $0x30] sm:$0xff] %v916
                %v918 = vld [vmem:[%s902 + $0x38] sm:$0xff]
                %919 = vst [vmem:[%s903 + $0x38] sm:$0xff] %v918
                %s920 = sadd.s32 1, %s901
                %p921 = scmp.ge.s32.totalorder %s920, %s894
                %s922 = scalar_select %p921, 0, %s920
                %s923 = smul.u32 %s922, 64
                %s924 = smul.u32 %s922, 64
                %s925 = scalar_lea.vmem %s867, %s923 [#allocation2]
                %s926 = scalar_lea.vmem %s885, %s924
              $region57: #{tpu_custom_call.1} parent=51 // loop_footer
                %s898 = sadd.s32 %s896, 1
              $region58: #{tpu_custom_call.1} parent=51 // loop_footer_branch
                %895 = sbr.rel target = $region54
              $region59: #{tpu_custom_call.1} parent=51 // loop_exit
                _
              %s927 = sshrl.u32 %s881, 3
              %s928 = sand.u32 %s881, 7
              %s929 = smul.u32 %s927, 8
              %s930 = smul.u32 8, %s929
              %s931 = scalar_lea.vmem %s867, %s930 [#allocation2]
              %s932 = smul.u32 8, %s929
              %s933 = scalar_lea.vmem %s885, %s932
              // While loop
              $region60: #{tpu_custom_call.1} parent=51 // loop_pre_header
                _
              $region61: #{tpu_custom_call.1} parent=51 // loop_header
                %s935 = sphi 0, %s937
                %p936 = scmp.ge.s32.totalorder %s935, %s928
                %s940 = sphi 0, %s947
                %s941 = sphi %s931, %s950
                %s942 = sphi %s933, %s951
              $region62: #{tpu_custom_call.1} parent=51 // loop_header_branch
                %939 = sbr.rel (%p936) target = $region66
              $region63: #{tpu_custom_call.1} parent=51 // loop_body
                %v943 = vld [vmem:[%s941] sm:$0xff]
                %944 = vst [vmem:[%s942] sm:$0xff] %v943
                %s945 = sadd.s32 1, %s940
                %p946 = scmp.ge.s32.totalorder %s945, %s928
                %s947 = scalar_select %p946, 0, %s945
                %s948 = smul.u32 %s947, 8
                %s949 = smul.u32 %s947, 8
                %s950 = scalar_lea.vmem %s931, %s948 [#allocation2]
                %s951 = scalar_lea.vmem %s933, %s949
              $region64: #{tpu_custom_call.1} parent=51 // loop_footer
                %s937 = sadd.s32 %s935, 1
              $region65: #{tpu_custom_call.1} parent=51 // loop_footer_branch
                %934 = sbr.rel target = $region61
              $region66: #{tpu_custom_call.1} parent=51 // loop_exit
                _
            $region52: #{tpu_custom_call.1} parent=43 // pred_fallthru
              _
          $region44: #{tpu_custom_call.1} parent=39 // pred_fallthru
            _
          %1014 = vnop
        $region40: #{tpu_custom_call.1} parent=27 // pred_fallthru
          _
        // Predicated region
        $region89: #{tpu_custom_call.1} parent=27 // pred_check
          %p1015 = pneg %p115
        $region90: #{tpu_custom_call.1} parent=27 // pred_check_branch
          %1017 = sbr.rel (%p1015) target = $region92
        $region91: #{tpu_custom_call.1} parent=27 // pred_region
          %s1019 = ssub.s32 16, 16
          %1020 = vsyncadd %s869, %s1019
          %s1021 = smul.addr %s19, 16
          %s1022 = scalar_lea.hbm %s3, %s1021
          %s1024 = sshll.u32 %s871, 4
          %s1025 = int_to_ptr.vmem [resolvable:$true] %s1024
          %1027 = dma.vmem_to_hbm [thread:$0]  %s1025, 16, %s1022, %s869
        $region92: #{tpu_custom_call.1} parent=27 // pred_fallthru
          _
        // Predicated region
        $region93: #{tpu_custom_call.1} parent=27 // pred_check
          %p1028 = pneg %p141
        $region94: #{tpu_custom_call.1} parent=27 // pred_check_branch
          %1030 = sbr.rel (%p1028) target = $region96
        $region95: #{tpu_custom_call.1} parent=27 // pred_region
          _
        $region96: #{tpu_custom_call.1} parent=27 // pred_fallthru
          _
      $region28: #{tpu_custom_call.1} parent=5 // pred_fallthru
        _
      %p1031 = scmp.le.s32.totalorder 2, %s14
      // Predicated region
      $region97: #{tpu_custom_call.1} parent=5 // pred_check
        %p1032 = pneg %p1031
      $region98: #{tpu_custom_call.1} parent=5 // pred_check_branch
        %1034 = sbr.rel (%p1032) target = $region100
      $region99: #{tpu_custom_call.1} parent=5 // pred_region
        %s1035 = ssub.s32 %s14, 2
        // Predicated region
        $region101: #{tpu_custom_call.1} parent=99 // pred_check
          %p1036 = pneg %p95
        $region102: #{tpu_custom_call.1} parent=99 // pred_check_branch
          %1038 = sbr.rel (%p1036) target = $region104
        $region103: #{tpu_custom_call.1} parent=99 // pred_region
          %s1039 = sand.u32 %s80, 1
          %s1040 = sand.u32 %s80, 1
          %s1041 = smul.addr %s1040, 64
          %s1042 = scalar_lea.vmem [#allocation2], %s1041
        $region104: #{tpu_custom_call.1} parent=99 // pred_fallthru
          _
        // Predicated region
        $region105: #{tpu_custom_call.1} parent=99 // pred_check
          %p1043 = pneg %p121
        $region106: #{tpu_custom_call.1} parent=99 // pred_check_branch
          %1045 = sbr.rel (%p1043) target = $region108
        $region107: #{tpu_custom_call.1} parent=99 // pred_region
          %s1046 = sand.u32 %s106, 1
          %s1047 = scalar_lea.sflag [#allocation4], %s1046
          %s1048 = sand.u32 %s106, 1
          %s1049 = scalar_lea.vmem [#allocation3], %s1048
          %1050 = dma.done %s1047, 16
        $region108: #{tpu_custom_call.1} parent=99 // pred_fallthru
          _
        // Predicated region
        $region109: #{tpu_custom_call.1} parent=99 // pred_check
          %p1051 = pneg %p147
        $region110: #{tpu_custom_call.1} parent=99 // pred_check_branch
          %1053 = sbr.rel (%p1051) target = $region112
        $region111: #{tpu_custom_call.1} parent=99 // pred_region
          %p1054 = scmp.lt.s32.totalorder %s20, 3
          %s1055 = scalar_select %p1054, %s20, 3
          %s1056 = scalar_lea.vmem %s4, %s1055
        $region112: #{tpu_custom_call.1} parent=99 // pred_fallthru
          _
      $region100: #{tpu_custom_call.1} parent=5 // pred_fallthru
        _
    $region6: #{tpu_custom_call.1} parent=1 // loop_footer
      %s18 = sadd.s32 1, %s14
    $region7: #{tpu_custom_call.1} parent=1 // loop_footer_branch
      %13 = sbr.rel target = $region3
    $region8: #{tpu_custom_call.1} parent=1 // loop_exit
      _
    %1057 = vsyncpa [#allocation4], 1
    %s1058 = scalar_lea.sflag [#allocation4], 1
    %1059 = vsyncpa %s1058, 1

</llo_original>
